<compile_context>
chip_gen: v6e
topology: v6e:2x2x1
jax: 0.10.0
libtpu: 0.0.40
codegen_flags: <defaults>
</compile_context>

<pallas_src>
import jax
import jax.numpy as jnp
from jax.experimental import pallas as pl
from jax.experimental.pallas import tpu as pltpu

# ---- module hyper-params (small, consistent with DynamicFeedForward) ----
B, S = 2, 8            # batch, seq_len (leading dims; flattened below)
D_IN = 32              # d_input
FF = 64                # dim_feedforward
D_OUT = 32             # d_output
M = B * S              # 16 rows
# dropout layers are identity in eval mode (no RNG needed).


def ffn_kernel(x_ref, w1_ref, b1_ref, w2_ref, b2_ref, y_ref):
    """Whole FFN in one invocation: y = relu(x @ W1 + b1) @ W2 + b2."""
    # First matmul on bf16 operands, f32 accumulation on the MXU.
    h = jnp.dot(x_ref[...], w1_ref[...],
                preferred_element_type=jnp.float32)          # (M, FF) f32
    h = jnp.maximum(h + b1_ref[...], 0.0)                    # bias + ReLU
    # dropout is identity (eval mode)
    h = h.astype(w2_ref.dtype)                                # bf16 for MXU
    y = jnp.dot(h, w2_ref[...],
                preferred_element_type=jnp.float32)           # (M, D_OUT) f32
    y_ref[...] = (y + b2_ref[...]).astype(y_ref.dtype)
    # dropout2 is identity (eval mode)


def dynamic_feed_forward(x, w1, b1, w2, b2):
    """x: [B, S, D_IN] f32 -> [B, S, D_OUT] f32 (dropouts = identity, eval)."""
    xf = x.reshape(M, D_IN).astype(jnp.bfloat16)
    w1b = w1.astype(jnp.bfloat16)
    w2b = w2.astype(jnp.bfloat16)
    b1r = b1.reshape(1, FF).astype(jnp.float32)
    b2r = b2.reshape(1, D_OUT).astype(jnp.float32)

    flops = 2 * M * (D_IN * FF + FF * D_OUT)
    bytes_accessed = (xf.size * 2 + w1b.size * 2 + w2b.size * 2
                      + b1r.size * 4 + b2r.size * 4 + M * D_OUT * 4)

    vmem = pl.BlockSpec(memory_space=pltpu.MemorySpace.VMEM)
    yf = pl.pallas_call(
        ffn_kernel,
        out_shape=jax.ShapeDtypeStruct((M, D_OUT), jnp.float32),
        in_specs=[vmem, vmem, vmem, vmem, vmem],
        out_specs=vmem,
        cost_estimate=pl.CostEstimate(
            flops=flops, transcendentals=0, bytes_accessed=bytes_accessed),
    )(xf, w1b, b1r, w2b, b2r)

    return yf.reshape(B, S, D_OUT)


def dynamic_feed_forward_ref(x, w1, b1, w2, b2):
    """Pure-JAX f32 reference (identical math)."""
    h = jnp.maximum(x @ w1 + b1, 0.0)
    return h @ w2 + b2


def make_params(key):
    ks = jax.random.split(key, 4)
    scale = 0.1
    w1 = scale * jax.random.normal(ks[0], (D_IN, FF), jnp.float32)   # linear1 W (x @ W)
    b1 = scale * jax.random.normal(ks[1], (FF,), jnp.float32)        # linear1 b
    w2 = scale * jax.random.normal(ks[2], (FF, D_OUT), jnp.float32)  # linear2 W
    b2 = scale * jax.random.normal(ks[3], (D_OUT,), jnp.float32)     # linear2 b
    return w1, b1, w2, b2


if __name__ == "__main__":
    key = jax.random.PRNGKey(0)
    kx, kp = jax.random.split(key)
    x = jax.random.normal(kx, (B, S, D_IN), jnp.float32)
    w1, b1, w2, b2 = make_params(kp)

    y = dynamic_feed_forward(x, w1, b1, w2, b2)
    y = jax.block_until_ready(y)

    y_ref = dynamic_feed_forward_ref(x, w1, b1, w2, b2)
    assert y.shape == (B, S, D_OUT)
    # bf16 MXU inputs with f32 accumulation -> loosened tolerance.
    assert jnp.allclose(y, y_ref, atol=2e-2, rtol=2e-2), "mismatch vs reference"
    print("KERNEL_OK")
</pallas_src>

<mosaic_0001>
module attributes {stable_mosaic.version = 11 : i64} {
  func.func @ffn_kernel(%arg0: memref<16x32xbf16, #tpu.memory_space<vmem>>, %arg1: memref<32x64xbf16, #tpu.memory_space<vmem>>, %arg2: memref<1x64xf32, #tpu.memory_space<vmem>>, %arg3: memref<64x32xbf16, #tpu.memory_space<vmem>>, %arg4: memref<1x32xf32, #tpu.memory_space<vmem>>, %arg5: memref<16x32xf32, #tpu.memory_space<vmem>>) attributes {dimension_semantics = [], scalar_prefetch = 0 : i64, scratch_operands = 0 : i64, tpu.core_type = #tpu.core_type<tc>} {
    %c0 = arith.constant 0 : index
    %c0_0 = arith.constant 0 : index
    %0 = vector.load %arg0[%c0, %c0_0] : memref<16x32xbf16, #tpu.memory_space<vmem>>, vector<16x32xbf16>
    %c0_1 = arith.constant 0 : index
    %c0_2 = arith.constant 0 : index
    %1 = vector.load %arg1[%c0_1, %c0_2] : memref<32x64xbf16, #tpu.memory_space<vmem>>, vector<32x64xbf16>
    %cst = arith.constant dense<0.000000e+00> : vector<16x64xf32>
    %2 = tpu.matmul %0, %1, %cst {dimension_numbers = #tpu.dot_dimension_numbers<[1], [0], [0], [1], [0, 0, 1, 1], [], []>} : vector<16x32xbf16>, vector<32x64xbf16>, vector<16x64xf32> -> vector<16x64xf32>
    %c0_3 = arith.constant 0 : index
    %c0_4 = arith.constant 0 : index
    %3 = vector.load %arg2[%c0_3, %c0_4] : memref<1x64xf32, #tpu.memory_space<vmem>>, vector<1x64xf32>
    %4 = vector.broadcast %3 : vector<1x64xf32> to vector<16x64xf32>
    %5 = arith.addf %2, %4 : vector<16x64xf32>
    %cst_5 = arith.constant 0.000000e+00 : f32
    %6 = vector.broadcast %cst_5 : f32 to vector<16x64xf32>
    %7 = arith.maximumf %5, %6 : vector<16x64xf32>
    %8 = arith.truncf %7 : vector<16x64xf32> to vector<16x64xbf16>
    %c0_6 = arith.constant 0 : index
    %c0_7 = arith.constant 0 : index
    %9 = vector.load %arg3[%c0_6, %c0_7] : memref<64x32xbf16, #tpu.memory_space<vmem>>, vector<64x32xbf16>
    %cst_8 = arith.constant dense<0.000000e+00> : vector<16x32xf32>
    %10 = tpu.matmul %8, %9, %cst_8 {dimension_numbers = #tpu.dot_dimension_numbers<[1], [0], [0], [1], [0, 0, 1, 1], [], []>} : vector<16x64xbf16>, vector<64x32xbf16>, vector<16x32xf32> -> vector<16x32xf32>
    %c0_9 = arith.constant 0 : index
    %c0_10 = arith.constant 0 : index
    %11 = vector.load %arg4[%c0_9, %c0_10] : memref<1x32xf32, #tpu.memory_space<vmem>>, vector<1x32xf32>
    %12 = vector.broadcast %11 : vector<1x32xf32> to vector<16x32xf32>
    %13 = arith.addf %10, %12 : vector<16x32xf32>
    %c0_11 = arith.constant 0 : index
    %c0_12 = arith.constant 0 : index
    %14 = vector.load %arg5[%c0_11, %c0_12] : memref<16x32xf32, #tpu.memory_space<vmem>>, vector<16x32xf32>
    tpu.vector_store %arg5[%c0_11, %c0_12], %13 {strides = array<i32>} : memref<16x32xf32, #tpu.memory_space<vmem>>, vector<16x32xf32>,
    return
  }
}

</mosaic_0001>

<llo_original>
// kernel: tpu_custom_call.1
$region0: #{tpu_custom_call.1}
  #allocation0 [shape = 'u32[]', space=smem, size = 0x4, offset = 0x4, fixed_abs, tag = 'smem constant byte address 0x4 - core index']
  #allocation1 [shape = 'u32[144,128]{1,0:T(1,128)}', space=vmem, size = 0x12000, scoped, tag = 'internal scratch']
  %s0 = inlined_call_operand.vmem [shape: bf16[16,32], index: 0, kind: input, shape index: {}]
  %s1 = inlined_call_operand.vmem [shape: bf16[32,64], index: 1, kind: input, shape index: {}]
  %s2 = inlined_call_operand.vmem [shape: f32[1,64], index: 2, kind: input, shape index: {}]
  %s3 = inlined_call_operand.vmem [shape: bf16[64,32], index: 3, kind: input, shape index: {}]
  %s4 = inlined_call_operand.vmem [shape: f32[1,32], index: 4, kind: input, shape index: {}]
  %s5 = inlined_call_operand.hbm [shape: f32[16,32], index: 5, kind: output, shape index: {}]
  %s6 = sld [smem:[#allocation0]]
  $region30: #{tpu_custom_call.1} parent=0
    _
  %s8 = ssub.s32 1, %s6
  %s9 = scalar_select 0, %s8, %s6
  $region1: #{tpu_custom_call.1} parent=0
    #allocation2 [shape = 'u8[8192]{0}', space=vmem, size = 0x2000, scoped, tag = 'output window, operand 0, single buffered']
    #allocation3 [shape = 's32[1]{0}', space=sflag, size = 0x4, scoped, tag = 'scoped memory for tpu_custom_call.1']
    %10 = vsyncpa [#allocation3], 0
    // Predicated region
    $region2: #{tpu_custom_call.1} parent=1 // pred_check
      _
    $region3: #{tpu_custom_call.1} parent=1 // pred_check_branch
      %12 = sbr.rel (0) target = $region5
    $region4: #{tpu_custom_call.1} parent=1 // pred_region
      _
    $region5: #{tpu_custom_call.1} parent=1 // pred_fallthru
      _
    // Predicated region
    $region6: #{tpu_custom_call.1} parent=1 // pred_check
      _
    $region7: #{tpu_custom_call.1} parent=1 // pred_check_branch
      %14 = sbr.rel (0) target = $region9
    $region8: #{tpu_custom_call.1} parent=1 // pred_region
      _
    $region9: #{tpu_custom_call.1} parent=1 // pred_fallthru
      _
    // Predicated region
    $region10: #{tpu_custom_call.1} parent=1 // pred_check
      _
    $region11: #{tpu_custom_call.1} parent=1 // pred_check_branch
      %16 = sbr.rel (0) target = $region13
    $region12: #{tpu_custom_call.1} parent=1 // pred_region
      _
    $region13: #{tpu_custom_call.1} parent=1 // pred_fallthru
      _
    // Predicated region
    $region14: #{tpu_custom_call.1} parent=1 // pred_check
      _
    $region15: #{tpu_custom_call.1} parent=1 // pred_check_branch
      %18 = sbr.rel (0) target = $region17
    $region16: #{tpu_custom_call.1} parent=1 // pred_region
      _
    $region17: #{tpu_custom_call.1} parent=1 // pred_fallthru
      _
    // Predicated region
    $region18: #{tpu_custom_call.1} parent=1 // pred_check
      _
    $region19: #{tpu_custom_call.1} parent=1 // pred_check_branch
      %20 = sbr.rel (0) target = $region21
    $region20: #{tpu_custom_call.1} parent=1 // pred_region
      _
    $region21: #{tpu_custom_call.1} parent=1 // pred_fallthru
      _
    %v22 = vld [vmem:[%s0] sm:$0xf]
    %v23 = vld [vmem:[%s0 + $0x4] sm:$0xf]
    %v24 = vld [vmem:[%s1] sm:$0xf]
    %v25 = vld [vmem:[%s1 + $0x4] sm:$0xf]
    %v26 = vld [vmem:[%s1 + $0x8] sm:$0xf]
    %v27 = vld [vmem:[%s1 + $0xc] sm:$0xf]
    %v28 = vld [vmem:[%s2] sm:$0x1]
    %v30 = vlaneseq
    %v31 = vshrl.u32 %v30, 7
    %v32 = vsub.s32 0, %v31
    %v33 = vrot.slane %v28, %v32
    %v37 = vunpack.c.l.b16 %v22
    %v38 = vunpack.c.l.b16 %v23
    %v39 = vpack.c.b16 %v38, %v37
    %v44 = vunpack.c.l.b16 %v24
    %v45 = vunpack.c.l.b16 %v25
    %v46 = vunpack.c.l.b16 %v26
    %v47 = vunpack.c.l.b16 %v27
    %v48 = vpack.c.b16 %v45, %v44
    %v49 = vpack.c.b16 %v47, %v46
    %vm52 = vcmask 261120
    %v54 = vsel %vm52, %v39, 0
    %56 = vmatprep.subr.bf16.mxu0 0
    %57 = vmatpush1.bf16.msra.mxu0 0
    %58 = vmatprep.subr.bf16.mxu0 0
    %59 = vmatpush1.bf16.msra.mxu0 0
    %60 = vmatprep.subr.bf16.mxu0 0
    %61 = vmatpush1.bf16.msra.mxu0 0
    %62 = vmatprep.subr.bf16.mxu0 0
    %63 = vmatpush1.bf16.msra.mxu0 0
    %64 = vmatprep.subr.bf16.mxu0 0
    %65 = vmatpush1.bf16.msra.mxu0 0
    %66 = vmatprep.subr.bf16.mxu0 0
    %67 = vmatpush1.bf16.msra.mxu0 0
    %68 = vmatprep.subr.bf16.mxu0 0
    %69 = vmatpush1.bf16.msra.mxu0 %v49
    %70 = vmatprep.subr.bf16.mxu0 0
    %71 = vmatpush1.bf16.msra.mxu0 %v48
    %72 = vmatprep.subr.bf16.mxu0 0
    %73 = vmatpush2.bf16.msra.mxu0 0
    %74 = vmatprep.subr.bf16.mxu0 0
    %75 = vmatpush2.bf16.msra.mxu0 0
    %76 = vmatprep.subr.bf16.mxu0 0
    %77 = vmatpush2.bf16.msra.mxu0 0
    %78 = vmatprep.subr.bf16.mxu0 0
    %79 = vmatpush2.bf16.msra.mxu0 0
    %80 = vmatprep.subr.bf16.mxu0 0
    %81 = vmatpush2.bf16.msra.mxu0 0
    %82 = vmatprep.subr.bf16.mxu0 0
    %83 = vmatpush2.bf16.msra.mxu0 0
    %84 = vmatprep.subr.bf16.mxu0 0
    %85 = vmatpush2.bf16.msra.mxu0 0
    %86 = vmatprep.subr.bf16.mxu0 0
    %87 = vmatpush2.bf16.msra.mxu0 0
    %88 = vmatprep.mubr.bf16.mxu0 0
    %89 = vmatmul.mubr.bf16.gmra.mxu0 %v54
    %v90 = vpop.f32.mrf.mxu0
    %v91 = vadd.f32 %v33, %v90
    %v92 = vpop.f32.mrf.mxu0
    %v93 = vpop.f32.mrf.mxu0
    %v94 = vadd.f32 %v33, %v93
    %v95 = vpop.f32.mrf.mxu0
    %96 = vdwg.mxu0
    %v97 = vmax.f32 %v91, 0.0
    %v98 = vmax.f32 %v94, 0.0
    %v99 = vpack.c.bf16 %v98, %v97
    %v100 = vld [vmem:[%s3] sm:$0xf]
    %v101 = vld [vmem:[%s3 + $0x4] sm:$0xf]
    %v102 = vld [vmem:[%s3 + $0x8] sm:$0xf]
    %v103 = vld [vmem:[%s3 + $0xc] sm:$0xf]
    %v104 = vld [vmem:[%s3 + $0x10] sm:$0xf]
    %v105 = vld [vmem:[%s3 + $0x14] sm:$0xf]
    %v106 = vld [vmem:[%s3 + $0x18] sm:$0xf]
    %v107 = vld [vmem:[%s3 + $0x1c] sm:$0xf]
    %v108 = vld [vmem:[%s4] sm:$0x1]
    %v110 = vlaneseq
    %v111 = vshrl.u32 %v110, 7
    %v112 = vsub.s32 0, %v111
    %v113 = vrot.slane %v108, %v112
    %v123 = vunpack.c.l.b16 %v100
    %v124 = vunpack.c.l.b16 %v101
    %v125 = vunpack.c.l.b16 %v102
    %v126 = vunpack.c.l.b16 %v103
    %v127 = vunpack.c.l.b16 %v104
    %v128 = vunpack.c.l.b16 %v105
    %v129 = vunpack.c.l.b16 %v106
    %v130 = vunpack.c.l.b16 %v107
    %v131 = vpack.c.b16 %v124, %v123
    %v132 = vpack.c.b16 %v126, %v125
    %v133 = vpack.c.b16 %v128, %v127
    %v134 = vpack.c.b16 %v130, %v129
    %vm139 = vcmask 523264
    %v141 = vsel %vm139, %v99, 0
    %143 = vmatprep.subr.bf16.mxu0 0
    %144 = vmatpush1.bf16.msra.mxu0 0
    %145 = vmatprep.subr.bf16.mxu0 0
    %146 = vmatpush1.bf16.msra.mxu0 0
    %147 = vmatprep.subr.bf16.mxu0 0
    %148 = vmatpush1.bf16.msra.mxu0 0
    %149 = vmatprep.subr.bf16.mxu0 0
    %150 = vmatpush1.bf16.msra.mxu0 0
    %151 = vmatprep.subr.bf16.mxu0 0
    %152 = vmatpush1.bf16.msra.mxu0 %v134
    %153 = vmatprep.subr.bf16.mxu0 0
    %154 = vmatpush1.bf16.msra.mxu0 %v133
    %155 = vmatprep.subr.bf16.mxu0 0
    %156 = vmatpush1.bf16.msra.mxu0 %v132
    %157 = vmatprep.subr.bf16.mxu0 0
    %158 = vmatpush1.bf16.msra.mxu0 %v131
    %159 = vmatprep.subr.bf16.mxu0 0
    %160 = vmatpush2.bf16.msra.mxu0 0
    %161 = vmatprep.subr.bf16.mxu0 0
    %162 = vmatpush2.bf16.msra.mxu0 0
    %163 = vmatprep.subr.bf16.mxu0 0
    %164 = vmatpush2.bf16.msra.mxu0 0
    %165 = vmatprep.subr.bf16.mxu0 0
    %166 = vmatpush2.bf16.msra.mxu0 0
    %167 = vmatprep.subr.bf16.mxu0 0
    %168 = vmatpush2.bf16.msra.mxu0 0
    %169 = vmatprep.subr.bf16.mxu0 0
    %170 = vmatpush2.bf16.msra.mxu0 0
    %171 = vmatprep.subr.bf16.mxu0 0
    %172 = vmatpush2.bf16.msra.mxu0 0
    %173 = vmatprep.subr.bf16.mxu0 0
    %174 = vmatpush2.bf16.msra.mxu0 0
    %175 = vmatprep.mubr.bf16.mxu0 0
    %176 = vmatmul.mubr.bf16.gmra.mxu0 %v141
    %v177 = vpop.f32.mrf.mxu0
    %v178 = vadd.f32 %v113, %v177
    %v179 = vpop.f32.mrf.mxu0
    %v180 = vpop.f32.mrf.mxu0
    %v181 = vadd.f32 %v113, %v180
    %v182 = vpop.f32.mrf.mxu0
    %183 = vdwg.mxu0
    %184 = vst.msk [vmem:[#allocation2] sm:$0xff] %vm52, %v178
    %185 = vst.msk [vmem:[#allocation2 + $0x8] sm:$0xff] %vm52, %v181
    // Predicated region
    $region22: #{tpu_custom_call.1} parent=1 // pred_check
      _
    $region23: #{tpu_custom_call.1} parent=1 // pred_check_branch
      %187 = sbr.rel (0) target = $region25
    $region24: #{tpu_custom_call.1} parent=1 // pred_region
      %s189 = ssub.s32 256, 256
      %190 = vsyncadd [#allocation3], %s189
      %s191 = sshll.u32 [#allocation2], 4
      %s192 = int_to_ptr.vmem [resolvable:$true] %s191
      %197 = dma.vmem_to_hbm [thread:$0]  %s192, 256, %s5, [#allocation3], 128, 128, 8
    $region25: #{tpu_custom_call.1} parent=1 // pred_fallthru
      _
    // Predicated region
    $region26: #{tpu_custom_call.1} parent=1 // pred_check
      _
    $region27: #{tpu_custom_call.1} parent=1 // pred_check_branch
      %199 = sbr.rel (0) target = $region29
    $region28: #{tpu_custom_call.1} parent=1 // pred_region
      %200 = dma.done [#allocation3], 256
    $region29: #{tpu_custom_call.1} parent=1 // pred_fallthru
      _
    %201 = vsyncpa [#allocation3], 1

</llo_original>
